<compile_context>
chip_gen: v7x
topology: tpu7x:2x2x1
jax: 0.10.0
libtpu: 0.0.40
codegen_flags: <defaults>
</compile_context>

<pallas_src>
import functools

import jax
import jax.numpy as jnp
from jax.experimental import pallas as pl
from jax.experimental.pallas import tpu as pltpu


def _lstm_fc_logsoftmax_kernel(x_ref, wih_ref, whh_ref, b_ref, wfc_ref, bfc_ref,
                               out_ref, h_sc, c_sc, xp_sc):
    """Single-layer LSTM over time, final hidden -> Linear -> LogSoftmax(dim=1).

    x_ref:   (S*B, I)   bf16  time-major flattened input (row t*B + b)
    wih_ref: (I, 4H)    bf16  (= weight_ih_l0.T)
    whh_ref: (H, 4H)    bf16  (= weight_hh_l0.T)
    b_ref:   (1, 4H)    f32   (= bias_ih_l0 + bias_hh_l0)
    wfc_ref: (H, O)     bf16  (= fc.weight.T)
    bfc_ref: (1, O)     f32
    out_ref: (B, O)     f32
    scratch: h_sc, c_sc (B, H) f32 ; xp_sc (S*B, 4H) f32
    """
    SB = x_ref.shape[0]
    B, H = h_sc.shape
    S = SB // B

    # ---- Hoisted input projection: one big MXU matmul, bias folded in once.
    xp_sc[...] = (
        jnp.dot(x_ref[...], wih_ref[...], preferred_element_type=jnp.float32)
        + b_ref[...]
    )

    h_sc[...] = jnp.zeros_like(h_sc)
    c_sc[...] = jnp.zeros_like(c_sc)

    # ---- Serial recurrence.  S is static and small -> fully unrolled so the
    # scheduler can overlap the recurrent matmul / EUP / VPU work of adjacent
    # steps where the data dependence allows it.
    for t in range(S):
        h = h_sc[...]
        c = c_sc[...]
        gates = xp_sc[pl.ds(t * B, B), :] + jnp.dot(
            h.astype(whh_ref.dtype), whh_ref[...],
            preferred_element_type=jnp.float32)                      # (B, 4H)
        # One full-width sigmoid (single EUP push over all 4H lanes) plus one
        # tanh on the g block, instead of four lane-sliced nonlinearities.
        sg = jax.nn.sigmoid(gates)
        i = sg[:, 0:H]
        f = sg[:, H:2 * H]
        o = sg[:, 3 * H:4 * H]
        g = jnp.tanh(gates[:, 2 * H:3 * H])
        c_new = f * c + i * g
        h_new = o * jnp.tanh(c_new)
        h_sc[...] = h_new
        c_sc[...] = c_new

    # ---- Final hidden -> FC -> LogSoftmax(dim=1), all in f32.
    # TODO(synk): pad output_size to a multiple of 128 for a lane-dense final
    # store if O ever grows (at O=8 the masked vst is negligible).
    h_final = h_sc[...]
    logits = (jnp.dot(h_final.astype(wfc_ref.dtype), wfc_ref[...],
                      preferred_element_type=jnp.float32)
              + bfc_ref[...])                                         # (B, O)
    m = jnp.max(logits, axis=1, keepdims=True)
    shifted = logits - m
    lse = jnp.log(jnp.sum(jnp.exp(shifted), axis=1, keepdims=True))
    out_ref[...] = shifted - lse


def prepare_params(params, hidden_dim, output_size, compute_dtype=jnp.bfloat16):
    """One-time parameter prep (outside the per-call hot path): transposes,
    bias reduction, and bf16 weight cast.  Accumulation stays f32 in-kernel."""
    return {
        "wih_t": params["weight_ih"].T.astype(compute_dtype),            # (I, 4H)
        "whh_t": params["weight_hh"].T.astype(compute_dtype),            # (H, 4H)
        "b": (params["bias_ih"] + params["bias_hh"])
             .reshape(1, 4 * hidden_dim).astype(jnp.float32),            # (1, 4H)
        "wfc_t": params["fc_weight"].T.astype(compute_dtype),            # (H, O)
        "bfc": params["fc_bias"].reshape(1, output_size)
               .astype(jnp.float32),                                     # (1, O)
    }


@functools.partial(jax.jit,
                   static_argnames=("input_size", "hidden_dim", "output_size"))
def net_forward(x, prep, *, input_size, hidden_dim, output_size):
    """Equivalent of Net.forward(x) for x of shape (batch, seq, input_size)."""
    S = x.shape[1]                      # torch: len(x[0])
    B = x.size // (S * input_size)      # torch: the -1 in x.view(S, -1, I)
    compute_dtype = prep["wih_t"].dtype
    # Contiguous reshape == torch's x.view(S, -1, I) with the leading two dims
    # flattened; no transpose, no data movement.
    x2d = jnp.reshape(x, (S * B, input_size)).astype(compute_dtype)

    # TODO(synk): for large B, add a batch grid axis with
    # dimension_semantics=("parallel",) so v7x's two TensorCores split the batch.
    # TODO(synk): for long S, stream x over a seq grid (or pl.ANY + manual DMA)
    # instead of keeping all of x VMEM-resident.
    out = pl.pallas_call(
        _lstm_fc_logsoftmax_kernel,
        out_shape=jax.ShapeDtypeStruct((B, output_size), jnp.float32),
        in_specs=[pl.BlockSpec(memory_space=pltpu.MemorySpace.VMEM)] * 6,
        out_specs=pl.BlockSpec(memory_space=pltpu.MemorySpace.VMEM),
        scratch_shapes=[
            pltpu.VMEM((B, hidden_dim), jnp.float32),             # h
            pltpu.VMEM((B, hidden_dim), jnp.float32),             # c
            pltpu.VMEM((S * B, 4 * hidden_dim), jnp.float32),     # x@Wih + b
        ],
    )(x2d, prep["wih_t"], prep["whh_t"], prep["b"], prep["wfc_t"], prep["bfc"])
    return out


def init_params(key, input_size, hidden_dim, output_size):
    """Deterministic param init (shapes match nn.LSTM(input, hidden) + nn.Linear)."""
    ks = jax.random.split(key, 6)
    s = 1.0 / jnp.sqrt(hidden_dim)
    return {
        "weight_ih": jax.random.uniform(ks[0], (4 * hidden_dim, input_size),
                                        jnp.float32, -s, s),
        "weight_hh": jax.random.uniform(ks[1], (4 * hidden_dim, hidden_dim),
                                        jnp.float32, -s, s),
        "bias_ih": jax.random.uniform(ks[2], (4 * hidden_dim,),
                                      jnp.float32, -s, s),
        "bias_hh": jax.random.uniform(ks[3], (4 * hidden_dim,),
                                      jnp.float32, -s, s),
        "fc_weight": jax.random.uniform(ks[4], (output_size, hidden_dim),
                                        jnp.float32, -s, s),
        "fc_bias": jax.random.uniform(ks[5], (output_size,),
                                      jnp.float32, -s, s),
    }


def _reference_forward(x, prep, input_size, hidden_dim, output_size):
    """Pure-JAX reference of the same math (same bf16 weights, f32 accum)."""
    S = x.shape[1]
    B = x.size // (S * input_size)
    H = hidden_dim
    x2d = jnp.reshape(x, (S * B, input_size)).astype(prep["wih_t"].dtype)
    xp = jnp.dot(x2d, prep["wih_t"],
                 preferred_element_type=jnp.float32) + prep["b"]
    h = jnp.zeros((B, H), jnp.float32)
    c = jnp.zeros((B, H), jnp.float32)
    for t in range(S):
        gates = xp[t * B:(t + 1) * B, :] + jnp.dot(
            h.astype(prep["whh_t"].dtype), prep["whh_t"],
            preferred_element_type=jnp.float32)
        i = jax.nn.sigmoid(gates[:, 0:H])
        f = jax.nn.sigmoid(gates[:, H:2 * H])
        g = jnp.tanh(gates[:, 2 * H:3 * H])
        o = jax.nn.sigmoid(gates[:, 3 * H:4 * H])
        c = f * c + i * g
        h = o * jnp.tanh(c)
    logits = jnp.dot(h.astype(prep["wfc_t"].dtype), prep["wfc_t"],
                     preferred_element_type=jnp.float32) + prep["bfc"]
    return jax.nn.log_softmax(logits, axis=1)


if __name__ == "__main__":
    # The original module accepts num_layers but builds a single-layer nn.LSTM;
    # we reproduce exactly that single-layer behavior.
    input_size, hidden_dim, output_size = 16, 32, 8
    batch, seq = 2, 8

    key = jax.random.PRNGKey(0)
    kx, kp = jax.random.split(key)
    x = jax.random.normal(kx, (batch, seq, input_size), jnp.float32)
    params = init_params(kp, input_size, hidden_dim, output_size)
    prep = prepare_params(params, hidden_dim, output_size)   # once, not per call

    out = net_forward(x, prep, input_size=input_size,
                      hidden_dim=hidden_dim, output_size=output_size)
    out = jax.block_until_ready(out)

    assert out.shape == (batch, output_size)
    # rows of log-softmax must exp-sum to 1
    assert jnp.allclose(jnp.exp(out).sum(axis=1), 1.0, atol=1e-5)
    # match the pure-JAX reference of the identical math
    ref = _reference_forward(x, prep, input_size, hidden_dim, output_size)
    assert jnp.allclose(out, ref, atol=5e-3, rtol=1e-3), (
        float(jnp.max(jnp.abs(out - ref))))
    print("KERNEL_OK")
</pallas_src>

<mosaic_0001>
module attributes {stable_mosaic.version = 11 : i64} {
  func.func @_lstm_fc_logsoftmax_kernel(%arg0: memref<16x16xbf16, #tpu.memory_space<vmem>>, %arg1: memref<16x128xbf16, #tpu.memory_space<vmem>>, %arg2: memref<32x128xbf16, #tpu.memory_space<vmem>>, %arg3: memref<1x128xf32, #tpu.memory_space<vmem>>, %arg4: memref<32x8xbf16, #tpu.memory_space<vmem>>, %arg5: memref<1x8xf32, #tpu.memory_space<vmem>>, %arg6: memref<2x8xf32, #tpu.memory_space<vmem>>, %arg7: memref<2x32xf32, #tpu.memory_space<vmem>>, %arg8: memref<2x32xf32, #tpu.memory_space<vmem>>, %arg9: memref<16x128xf32, #tpu.memory_space<vmem>>) attributes {dimension_semantics = [], scalar_prefetch = 0 : i64, scratch_operands = 3 : i64, tpu.core_type = #tpu.core_type<tc>} {
    %c0 = arith.constant 0 : index
    %c0_0 = arith.constant 0 : index
    %0 = vector.load %arg0[%c0, %c0_0] : memref<16x16xbf16, #tpu.memory_space<vmem>>, vector<16x16xbf16>
    %c0_1 = arith.constant 0 : index
    %c0_2 = arith.constant 0 : index
    %1 = vector.load %arg1[%c0_1, %c0_2] : memref<16x128xbf16, #tpu.memory_space<vmem>>, vector<16x128xbf16>
    %cst = arith.constant dense<0.000000e+00> : vector<16x128xf32>
    %2 = tpu.matmul %0, %1, %cst {dimension_numbers = #tpu.dot_dimension_numbers<[1], [0], [0], [1], [0, 0, 1, 1], [], []>} : vector<16x16xbf16>, vector<16x128xbf16>, vector<16x128xf32> -> vector<16x128xf32>
    %c0_3 = arith.constant 0 : index
    %c0_4 = arith.constant 0 : index
    %3 = vector.load %arg3[%c0_3, %c0_4] : memref<1x128xf32, #tpu.memory_space<vmem>>, vector<1x128xf32>
    %4 = vector.broadcast %3 : vector<1x128xf32> to vector<16x128xf32>
    %5 = arith.addf %2, %4 : vector<16x128xf32>
    %c0_5 = arith.constant 0 : index
    %c0_6 = arith.constant 0 : index
    %6 = vector.load %arg9[%c0_5, %c0_6] : memref<16x128xf32, #tpu.memory_space<vmem>>, vector<16x128xf32>
    tpu.vector_store %arg9[%c0_5, %c0_6], %5 {strides = array<i32>} : memref<16x128xf32, #tpu.memory_space<vmem>>, vector<16x128xf32>,
    %cst_7 = arith.constant 0.000000e+00 : f32
    %7 = vector.broadcast %cst_7 : f32 to vector<2x32xf32>
    %c0_8 = arith.constant 0 : index
    %c0_9 = arith.constant 0 : index
    %8 = vector.load %arg7[%c0_8, %c0_9] : memref<2x32xf32, #tpu.memory_space<vmem>>, vector<2x32xf32>
    tpu.vector_store %arg7[%c0_8, %c0_9], %7 {strides = array<i32>} : memref<2x32xf32, #tpu.memory_space<vmem>>, vector<2x32xf32>,
    %cst_10 = arith.constant 0.000000e+00 : f32
    %9 = vector.broadcast %cst_10 : f32 to vector<2x32xf32>
    %c0_11 = arith.constant 0 : index
    %c0_12 = arith.constant 0 : index
    %10 = vector.load %arg8[%c0_11, %c0_12] : memref<2x32xf32, #tpu.memory_space<vmem>>, vector<2x32xf32>
    tpu.vector_store %arg8[%c0_11, %c0_12], %9 {strides = array<i32>} : memref<2x32xf32, #tpu.memory_space<vmem>>, vector<2x32xf32>,
    %c0_13 = arith.constant 0 : index
    %c0_14 = arith.constant 0 : index
    %11 = vector.load %arg7[%c0_13, %c0_14] : memref<2x32xf32, #tpu.memory_space<vmem>>, vector<2x32xf32>
    %c0_15 = arith.constant 0 : index
    %c0_16 = arith.constant 0 : index
    %12 = vector.load %arg8[%c0_15, %c0_16] : memref<2x32xf32, #tpu.memory_space<vmem>>, vector<2x32xf32>
    %c0_17 = arith.constant 0 : index
    %c0_18 = arith.constant 0 : index
    %13 = vector.load %arg9[%c0_17, %c0_18] : memref<16x128xf32, #tpu.memory_space<vmem>>, vector<2x128xf32>
    %14 = arith.truncf %11 : vector<2x32xf32> to vector<2x32xbf16>
    %c0_19 = arith.constant 0 : index
    %c0_20 = arith.constant 0 : index
    %15 = vector.load %arg2[%c0_19, %c0_20] : memref<32x128xbf16, #tpu.memory_space<vmem>>, vector<32x128xbf16>
    %cst_21 = arith.constant dense<0.000000e+00> : vector<2x128xf32>
    %16 = tpu.matmul %14, %15, %cst_21 {dimension_numbers = #tpu.dot_dimension_numbers<[1], [0], [0], [1], [0, 0, 1, 1], [], []>} : vector<2x32xbf16>, vector<32x128xbf16>, vector<2x128xf32> -> vector<2x128xf32>
    %17 = arith.addf %13, %16 : vector<2x128xf32>
    %18 = arith.negf %17 : vector<2x128xf32>
    %19 = math.exp %18 : vector<2x128xf32>
    %cst_22 = arith.constant 1.000000e+00 : f32
    %20 = vector.broadcast %cst_22 : f32 to vector<2x128xf32>
    %21 = arith.addf %20, %19 : vector<2x128xf32>
    %22 = arith.divf %20, %21 : vector<2x128xf32>
    %23 = vector.extract_strided_slice %22 {offsets = [0, 0], sizes = [2, 32], strides = [1, 1]} : vector<2x128xf32> to vector<2x32xf32>
    %24 = vector.extract_strided_slice %22 {offsets = [0, 32], sizes = [2, 32], strides = [1, 1]} : vector<2x128xf32> to vector<2x32xf32>
    %25 = vector.extract_strided_slice %22 {offsets = [0, 96], sizes = [2, 32], strides = [1, 1]} : vector<2x128xf32> to vector<2x32xf32>
    %26 = vector.extract_strided_slice %17 {offsets = [0, 64], sizes = [2, 32], strides = [1, 1]} : vector<2x128xf32> to vector<2x32xf32>
    %27 = math.tanh %26 : vector<2x32xf32>
    %28 = arith.mulf %24, %12 : vector<2x32xf32>
    %29 = arith.mulf %23, %27 : vector<2x32xf32>
    %30 = arith.addf %28, %29 : vector<2x32xf32>
    %31 = math.tanh %30 : vector<2x32xf32>
    %32 = arith.mulf %25, %31 : vector<2x32xf32>
    %c0_23 = arith.constant 0 : index
    %c0_24 = arith.constant 0 : index
    %33 = vector.load %arg7[%c0_23, %c0_24] : memref<2x32xf32, #tpu.memory_space<vmem>>, vector<2x32xf32>
    tpu.vector_store %arg7[%c0_23, %c0_24], %32 {strides = array<i32>} : memref<2x32xf32, #tpu.memory_space<vmem>>, vector<2x32xf32>,
    %c0_25 = arith.constant 0 : index
    %c0_26 = arith.constant 0 : index
    %34 = vector.load %arg8[%c0_25, %c0_26] : memref<2x32xf32, #tpu.memory_space<vmem>>, vector<2x32xf32>
    tpu.vector_store %arg8[%c0_25, %c0_26], %30 {strides = array<i32>} : memref<2x32xf32, #tpu.memory_space<vmem>>, vector<2x32xf32>,
    %c0_27 = arith.constant 0 : index
    %c0_28 = arith.constant 0 : index
    %35 = vector.load %arg7[%c0_27, %c0_28] : memref<2x32xf32, #tpu.memory_space<vmem>>, vector<2x32xf32>
    %c0_29 = arith.constant 0 : index
    %c0_30 = arith.constant 0 : index
    %36 = vector.load %arg8[%c0_29, %c0_30] : memref<2x32xf32, #tpu.memory_space<vmem>>, vector<2x32xf32>
    %c2 = arith.constant 2 : index
    %c0_31 = arith.constant 0 : index
    %37 = vector.load %arg9[%c2, %c0_31] : memref<16x128xf32, #tpu.memory_space<vmem>>, vector<2x128xf32>
    %38 = arith.truncf %35 : vector<2x32xf32> to vector<2x32xbf16>
    %c0_32 = arith.constant 0 : index
    %c0_33 = arith.constant 0 : index
    %39 = vector.load %arg2[%c0_32, %c0_33] : memref<32x128xbf16, #tpu.memory_space<vmem>>, vector<32x128xbf16>
    %cst_34 = arith.constant dense<0.000000e+00> : vector<2x128xf32>
    %40 = tpu.matmul %38, %39, %cst_34 {dimension_numbers = #tpu.dot_dimension_numbers<[1], [0], [0], [1], [0, 0, 1, 1], [], []>} : vector<2x32xbf16>, vector<32x128xbf16>, vector<2x128xf32> -> vector<2x128xf32>
    %41 = arith.addf %37, %40 : vector<2x128xf32>
    %42 = arith.negf %41 : vector<2x128xf32>
    %43 = math.exp %42 : vector<2x128xf32>
    %cst_35 = arith.constant 1.000000e+00 : f32
    %44 = vector.broadcast %cst_35 : f32 to vector<2x128xf32>
    %45 = arith.addf %44, %43 : vector<2x128xf32>
    %46 = arith.divf %44, %45 : vector<2x128xf32>
    %47 = vector.extract_strided_slice %46 {offsets = [0, 0], sizes = [2, 32], strides = [1, 1]} : vector<2x128xf32> to vector<2x32xf32>
    %48 = vector.extract_strided_slice %46 {offsets = [0, 32], sizes = [2, 32], strides = [1, 1]} : vector<2x128xf32> to vector<2x32xf32>
    %49 = vector.extract_strided_slice %46 {offsets = [0, 96], sizes = [2, 32], strides = [1, 1]} : vector<2x128xf32> to vector<2x32xf32>
    %50 = vector.extract_strided_slice %41 {offsets = [0, 64], sizes = [2, 32], strides = [1, 1]} : vector<2x128xf32> to vector<2x32xf32>
    %51 = math.tanh %50 : vector<2x32xf32>
    %52 = arith.mulf %48, %36 : vector<2x32xf32>
    %53 = arith.mulf %47, %51 : vector<2x32xf32>
    %54 = arith.addf %52, %53 : vector<2x32xf32>
    %55 = math.tanh %54 : vector<2x32xf32>
    %56 = arith.mulf %49, %55 : vector<2x32xf32>
    %c0_36 = arith.constant 0 : index
    %c0_37 = arith.constant 0 : index
    %57 = vector.load %arg7[%c0_36, %c0_37] : memref<2x32xf32, #tpu.memory_space<vmem>>, vector<2x32xf32>
    tpu.vector_store %arg7[%c0_36, %c0_37], %56 {strides = array<i32>} : memref<2x32xf32, #tpu.memory_space<vmem>>, vector<2x32xf32>,
    %c0_38 = arith.constant 0 : index
    %c0_39 = arith.constant 0 : index
    %58 = vector.load %arg8[%c0_38, %c0_39] : memref<2x32xf32, #tpu.memory_space<vmem>>, vector<2x32xf32>
    tpu.vector_store %arg8[%c0_38, %c0_39], %54 {strides = array<i32>} : memref<2x32xf32, #tpu.memory_space<vmem>>, vector<2x32xf32>,
    %c0_40 = arith.constant 0 : index
    %c0_41 = arith.constant 0 : index
    %59 = vector.load %arg7[%c0_40, %c0_41] : memref<2x32xf32, #tpu.memory_space<vmem>>, vector<2x32xf32>
    %c0_42 = arith.constant 0 : index
    %c0_43 = arith.constant 0 : index
    %60 = vector.load %arg8[%c0_42, %c0_43] : memref<2x32xf32, #tpu.memory_space<vmem>>, vector<2x32xf32>
    %c4 = arith.constant 4 : index
    %c0_44 = arith.constant 0 : index
    %61 = vector.load %arg9[%c4, %c0_44] : memref<16x128xf32, #tpu.memory_space<vmem>>, vector<2x128xf32>
    %62 = arith.truncf %59 : vector<2x32xf32> to vector<2x32xbf16>
    %c0_45 = arith.constant 0 : index
    %c0_46 = arith.constant 0 : index
    %63 = vector.load %arg2[%c0_45, %c0_46] : memref<32x128xbf16, #tpu.memory_space<vmem>>, vector<32x128xbf16>
    %cst_47 = arith.constant dense<0.000000e+00> : vector<2x128xf32>
    %64 = tpu.matmul %62, %63, %cst_47 {dimension_numbers = #tpu.dot_dimension_numbers<[1], [0], [0], [1], [0, 0, 1, 1], [], []>} : vector<2x32xbf16>, vector<32x128xbf16>, vector<2x128xf32> -> vector<2x128xf32>
    %65 = arith.addf %61, %64 : vector<2x128xf32>
    %66 = arith.negf %65 : vector<2x128xf32>
    %67 = math.exp %66 : vector<2x128xf32>
    %cst_48 = arith.constant 1.000000e+00 : f32
    %68 = vector.broadcast %cst_48 : f32 to vector<2x128xf32>
    %69 = arith.addf %68, %67 : vector<2x128xf32>
    %70 = arith.divf %68, %69 : vector<2x128xf32>
    %71 = vector.extract_strided_slice %70 {offsets = [0, 0], sizes = [2, 32], strides = [1, 1]} : vector<2x128xf32> to vector<2x32xf32>
    %72 = vector.extract_strided_slice %70 {offsets = [0, 32], sizes = [2, 32], strides = [1, 1]} : vector<2x128xf32> to vector<2x32xf32>
    %73 = vector.extract_strided_slice %70 {offsets = [0, 96], sizes = [2, 32], strides = [1, 1]} : vector<2x128xf32> to vector<2x32xf32>
    %74 = vector.extract_strided_slice %65 {offsets = [0, 64], sizes = [2, 32], strides = [1, 1]} : vector<2x128xf32> to vector<2x32xf32>
    %75 = math.tanh %74 : vector<2x32xf32>
    %76 = arith.mulf %72, %60 : vector<2x32xf32>
    %77 = arith.mulf %71, %75 : vector<2x32xf32>
    %78 = arith.addf %76, %77 : vector<2x32xf32>
    %79 = math.tanh %78 : vector<2x32xf32>
    %80 = arith.mulf %73, %79 : vector<2x32xf32>
    %c0_49 = arith.constant 0 : index
    %c0_50 = arith.constant 0 : index
    %81 = vector.load %arg7[%c0_49, %c0_50] : memref<2x32xf32, #tpu.memory_space<vmem>>, vector<2x32xf32>
    tpu.vector_store %arg7[%c0_49, %c0_50], %80 {strides = array<i32>} : memref<2x32xf32, #tpu.memory_space<vmem>>, vector<2x32xf32>,
    %c0_51 = arith.constant 0 : index
    %c0_52 = arith.constant 0 : index
    %82 = vector.load %arg8[%c0_51, %c0_52] : memref<2x32xf32, #tpu.memory_space<vmem>>, vector<2x32xf32>
    tpu.vector_store %arg8[%c0_51, %c0_52], %78 {strides = array<i32>} : memref<2x32xf32, #tpu.memory_space<vmem>>, vector<2x32xf32>,
    %c0_53 = arith.constant 0 : index
    %c0_54 = arith.constant 0 : index
    %83 = vector.load %arg7[%c0_53, %c0_54] : memref<2x32xf32, #tpu.memory_space<vmem>>, vector<2x32xf32>
    %c0_55 = arith.constant 0 : index
    %c0_56 = arith.constant 0 : index
    %84 = vector.load %arg8[%c0_55, %c0_56] : memref<2x32xf32, #tpu.memory_space<vmem>>, vector<2x32xf32>
    %c6 = arith.constant 6 : index
    %c0_57 = arith.constant 0 : index
    %85 = vector.load %arg9[%c6, %c0_57] : memref<16x128xf32, #tpu.memory_space<vmem>>, vector<2x128xf32>
    %86 = arith.truncf %83 : vector<2x32xf32> to vector<2x32xbf16>
    %c0_58 = arith.constant 0 : index
    %c0_59 = arith.constant 0 : index
    %87 = vector.load %arg2[%c0_58, %c0_59] : memref<32x128xbf16, #tpu.memory_space<vmem>>, vector<32x128xbf16>
    %cst_60 = arith.constant dense<0.000000e+00> : vector<2x128xf32>
    %88 = tpu.matmul %86, %87, %cst_60 {dimension_numbers = #tpu.dot_dimension_numbers<[1], [0], [0], [1], [0, 0, 1, 1], [], []>} : vector<2x32xbf16>, vector<32x128xbf16>, vector<2x128xf32> -> vector<2x128xf32>
    %89 = arith.addf %85, %88 : vector<2x128xf32>
    %90 = arith.negf %89 : vector<2x128xf32>
    %91 = math.exp %90 : vector<2x128xf32>
    %cst_61 = arith.constant 1.000000e+00 : f32
    %92 = vector.broadcast %cst_61 : f32 to vector<2x128xf32>
    %93 = arith.addf %92, %91 : vector<2x128xf32>
    %94 = arith.divf %92, %93 : vector<2x128xf32>
    %95 = vector.extract_strided_slice %94 {offsets = [0, 0], sizes = [2, 32], strides = [1, 1]} : vector<2x128xf32> to vector<2x32xf32>
    %96 = vector.extract_strided_slice %94 {offsets = [0, 32], sizes = [2, 32], strides = [1, 1]} : vector<2x128xf32> to vector<2x32xf32>
    %97 = vector.extract_strided_slice %94 {offsets = [0, 96], sizes = [2, 32], strides = [1, 1]} : vector<2x128xf32> to vector<2x32xf32>
    %98 = vector.extract_strided_slice %89 {offsets = [0, 64], sizes = [2, 32], strides = [1, 1]} : vector<2x128xf32> to vector<2x32xf32>
    %99 = math.tanh %98 : vector<2x32xf32>
    %100 = arith.mulf %96, %84 : vector<2x32xf32>
    %101 = arith.mulf %95, %99 : vector<2x32xf32>
    %102 = arith.addf %100, %101 : vector<2x32xf32>
    %103 = math.tanh %102 : vector<2x32xf32>
    %104 = arith.mulf %97, %103 : vector<2x32xf32>
    %c0_62 = arith.constant 0 : index
    %c0_63 = arith.constant 0 : index
    %105 = vector.load %arg7[%c0_62, %c0_63] : memref<2x32xf32, #tpu.memory_space<vmem>>, vector<2x32xf32>
    tpu.vector_store %arg7[%c0_62, %c0_63], %104 {strides = array<i32>} : memref<2x32xf32, #tpu.memory_space<vmem>>, vector<2x32xf32>,
    %c0_64 = arith.constant 0 : index
    %c0_65 = arith.constant 0 : index
    %106 = vector.load %arg8[%c0_64, %c0_65] : memref<2x32xf32, #tpu.memory_space<vmem>>, vector<2x32xf32>
    tpu.vector_store %arg8[%c0_64, %c0_65], %102 {strides = array<i32>} : memref<2x32xf32, #tpu.memory_space<vmem>>, vector<2x32xf32>,
    %c0_66 = arith.constant 0 : index
    %c0_67 = arith.constant 0 : index
    %107 = vector.load %arg7[%c0_66, %c0_67] : memref<2x32xf32, #tpu.memory_space<vmem>>, vector<2x32xf32>
    %c0_68 = arith.constant 0 : index
    %c0_69 = arith.constant 0 : index
    %108 = vector.load %arg8[%c0_68, %c0_69] : memref<2x32xf32, #tpu.memory_space<vmem>>, vector<2x32xf32>
    %c8 = arith.constant 8 : index
    %c0_70 = arith.constant 0 : index
    %109 = vector.load %arg9[%c8, %c0_70] : memref<16x128xf32, #tpu.memory_space<vmem>>, vector<2x128xf32>
    %110 = arith.truncf %107 : vector<2x32xf32> to vector<2x32xbf16>
    %c0_71 = arith.constant 0 : index
    %c0_72 = arith.constant 0 : index
    %111 = vector.load %arg2[%c0_71, %c0_72] : memref<32x128xbf16, #tpu.memory_space<vmem>>, vector<32x128xbf16>
    %cst_73 = arith.constant dense<0.000000e+00> : vector<2x128xf32>
    %112 = tpu.matmul %110, %111, %cst_73 {dimension_numbers = #tpu.dot_dimension_numbers<[1], [0], [0], [1], [0, 0, 1, 1], [], []>} : vector<2x32xbf16>, vector<32x128xbf16>, vector<2x128xf32> -> vector<2x128xf32>
    %113 = arith.addf %109, %112 : vector<2x128xf32>
    %114 = arith.negf %113 : vector<2x128xf32>
    %115 = math.exp %114 : vector<2x128xf32>
    %cst_74 = arith.constant 1.000000e+00 : f32
    %116 = vector.broadcast %cst_74 : f32 to vector<2x128xf32>
    %117 = arith.addf %116, %115 : vector<2x128xf32>
    %118 = arith.divf %116, %117 : vector<2x128xf32>
    %119 = vector.extract_strided_slice %118 {offsets = [0, 0], sizes = [2, 32], strides = [1, 1]} : vector<2x128xf32> to vector<2x32xf32>
    %120 = vector.extract_strided_slice %118 {offsets = [0, 32], sizes = [2, 32], strides = [1, 1]} : vector<2x128xf32> to vector<2x32xf32>
    %121 = vector.extract_strided_slice %118 {offsets = [0, 96], sizes = [2, 32], strides = [1, 1]} : vector<2x128xf32> to vector<2x32xf32>
    %122 = vector.extract_strided_slice %113 {offsets = [0, 64], sizes = [2, 32], strides = [1, 1]} : vector<2x128xf32> to vector<2x32xf32>
    %123 = math.tanh %122 : vector<2x32xf32>
    %124 = arith.mulf %120, %108 : vector<2x32xf32>
    %125 = arith.mulf %119, %123 : vector<2x32xf32>
    %126 = arith.addf %124, %125 : vector<2x32xf32>
    %127 = math.tanh %126 : vector<2x32xf32>
    %128 = arith.mulf %121, %127 : vector<2x32xf32>
    %c0_75 = arith.constant 0 : index
    %c0_76 = arith.constant 0 : index
    %129 = vector.load %arg7[%c0_75, %c0_76] : memref<2x32xf32, #tpu.memory_space<vmem>>, vector<2x32xf32>
    tpu.vector_store %arg7[%c0_75, %c0_76], %128 {strides = array<i32>} : memref<2x32xf32, #tpu.memory_space<vmem>>, vector<2x32xf32>,
    %c0_77 = arith.constant 0 : index
    %c0_78 = arith.constant 0 : index
    %130 = vector.load %arg8[%c0_77, %c0_78] : memref<2x32xf32, #tpu.memory_space<vmem>>, vector<2x32xf32>
    tpu.vector_store %arg8[%c0_77, %c0_78], %126 {strides = array<i32>} : memref<2x32xf32, #tpu.memory_space<vmem>>, vector<2x32xf32>,
    %c0_79 = arith.constant 0 : index
    %c0_80 = arith.constant 0 : index
    %131 = vector.load %arg7[%c0_79, %c0_80] : memref<2x32xf32, #tpu.memory_space<vmem>>, vector<2x32xf32>
    %c0_81 = arith.constant 0 : index
    %c0_82 = arith.constant 0 : index
    %132 = vector.load %arg8[%c0_81, %c0_82] : memref<2x32xf32, #tpu.memory_space<vmem>>, vector<2x32xf32>
    %c10 = arith.constant 10 : index
    %c0_83 = arith.constant 0 : index
    %133 = vector.load %arg9[%c10, %c0_83] : memref<16x128xf32, #tpu.memory_space<vmem>>, vector<2x128xf32>
    %134 = arith.truncf %131 : vector<2x32xf32> to vector<2x32xbf16>
    %c0_84 = arith.constant 0 : index
    %c0_85 = arith.constant 0 : index
    %135 = vector.load %arg2[%c0_84, %c0_85] : memref<32x128xbf16, #tpu.memory_space<vmem>>, vector<32x128xbf16>
    %cst_86 = arith.constant dense<0.000000e+00> : vector<2x128xf32>
    %136 = tpu.matmul %134, %135, %cst_86 {dimension_numbers = #tpu.dot_dimension_numbers<[1], [0], [0], [1], [0, 0, 1, 1], [], []>} : vector<2x32xbf16>, vector<32x128xbf16>, vector<2x128xf32> -> vector<2x128xf32>
    %137 = arith.addf %133, %136 : vector<2x128xf32>
    %138 = arith.negf %137 : vector<2x128xf32>
    %139 = math.exp %138 : vector<2x128xf32>
    %cst_87 = arith.constant 1.000000e+00 : f32
    %140 = vector.broadcast %cst_87 : f32 to vector<2x128xf32>
    %141 = arith.addf %140, %139 : vector<2x128xf32>
    %142 = arith.divf %140, %141 : vector<2x128xf32>
    %143 = vector.extract_strided_slice %142 {offsets = [0, 0], sizes = [2, 32], strides = [1, 1]} : vector<2x128xf32> to vector<2x32xf32>
    %144 = vector.extract_strided_slice %142 {offsets = [0, 32], sizes = [2, 32], strides = [1, 1]} : vector<2x128xf32> to vector<2x32xf32>
    %145 = vector.extract_strided_slice %142 {offsets = [0, 96], sizes = [2, 32], strides = [1, 1]} : vector<2x128xf32> to vector<2x32xf32>
    %146 = vector.extract_strided_slice %137 {offsets = [0, 64], sizes = [2, 32], strides = [1, 1]} : vector<2x128xf32> to vector<2x32xf32>
    %147 = math.tanh %146 : vector<2x32xf32>
    %148 = arith.mulf %144, %132 : vector<2x32xf32>
    %149 = arith.mulf %143, %147 : vector<2x32xf32>
    %150 = arith.addf %148, %149 : vector<2x32xf32>
    %151 = math.tanh %150 : vector<2x32xf32>
    %152 = arith.mulf %145, %151 : vector<2x32xf32>
    %c0_88 = arith.constant 0 : index
    %c0_89 = arith.constant 0 : index
    %153 = vector.load %arg7[%c0_88, %c0_89] : memref<2x32xf32, #tpu.memory_space<vmem>>, vector<2x32xf32>
    tpu.vector_store %arg7[%c0_88, %c0_89], %152 {strides = array<i32>} : memref<2x32xf32, #tpu.memory_space<vmem>>, vector<2x32xf32>,
    %c0_90 = arith.constant 0 : index
    %c0_91 = arith.constant 0 : index
    %154 = vector.load %arg8[%c0_90, %c0_91] : memref<2x32xf32, #tpu.memory_space<vmem>>, vector<2x32xf32>
    tpu.vector_store %arg8[%c0_90, %c0_91], %150 {strides = array<i32>} : memref<2x32xf32, #tpu.memory_space<vmem>>, vector<2x32xf32>,
    %c0_92 = arith.constant 0 : index
    %c0_93 = arith.constant 0 : index
    %155 = vector.load %arg7[%c0_92, %c0_93] : memref<2x32xf32, #tpu.memory_space<vmem>>, vector<2x32xf32>
    %c0_94 = arith.constant 0 : index
    %c0_95 = arith.constant 0 : index
    %156 = vector.load %arg8[%c0_94, %c0_95] : memref<2x32xf32, #tpu.memory_space<vmem>>, vector<2x32xf32>
    %c12 = arith.constant 12 : index
    %c0_96 = arith.constant 0 : index
    %157 = vector.load %arg9[%c12, %c0_96] : memref<16x128xf32, #tpu.memory_space<vmem>>, vector<2x128xf32>
    %158 = arith.truncf %155 : vector<2x32xf32> to vector<2x32xbf16>
    %c0_97 = arith.constant 0 : index
    %c0_98 = arith.constant 0 : index
    %159 = vector.load %arg2[%c0_97, %c0_98] : memref<32x128xbf16, #tpu.memory_space<vmem>>, vector<32x128xbf16>
    %cst_99 = arith.constant dense<0.000000e+00> : vector<2x128xf32>
    %160 = tpu.matmul %158, %159, %cst_99 {dimension_numbers = #tpu.dot_dimension_numbers<[1], [0], [0], [1], [0, 0, 1, 1], [], []>} : vector<2x32xbf16>, vector<32x128xbf16>, vector<2x128xf32> -> vector<2x128xf32>
    %161 = arith.addf %157, %160 : vector<2x128xf32>
    %162 = arith.negf %161 : vector<2x128xf32>
    %163 = math.exp %162 : vector<2x128xf32>
    %cst_100 = arith.constant 1.000000e+00 : f32
    %164 = vector.broadcast %cst_100 : f32 to vector<2x128xf32>
    %165 = arith.addf %164, %163 : vector<2x128xf32>
    %166 = arith.divf %164, %165 : vector<2x128xf32>
    %167 = vector.extract_strided_slice %166 {offsets = [0, 0], sizes = [2, 32], strides = [1, 1]} : vector<2x128xf32> to vector<2x32xf32>
    %168 = vector.extract_strided_slice %166 {offsets = [0, 32], sizes = [2, 32], strides = [1, 1]} : vector<2x128xf32> to vector<2x32xf32>
    %169 = vector.extract_strided_slice %166 {offsets = [0, 96], sizes = [2, 32], strides = [1, 1]} : vector<2x128xf32> to vector<2x32xf32>
    %170 = vector.extract_strided_slice %161 {offsets = [0, 64], sizes = [2, 32], strides = [1, 1]} : vector<2x128xf32> to vector<2x32xf32>
    %171 = math.tanh %170 : vector<2x32xf32>
    %172 = arith.mulf %168, %156 : vector<2x32xf32>
    %173 = arith.mulf %167, %171 : vector<2x32xf32>
    %174 = arith.addf %172, %173 : vector<2x32xf32>
    %175 = math.tanh %174 : vector<2x32xf32>
    %176 = arith.mulf %169, %175 : vector<2x32xf32>
    %c0_101 = arith.constant 0 : index
    %c0_102 = arith.constant 0 : index
    %177 = vector.load %arg7[%c0_101, %c0_102] : memref<2x32xf32, #tpu.memory_space<vmem>>, vector<2x32xf32>
    tpu.vector_store %arg7[%c0_101, %c0_102], %176 {strides = array<i32>} : memref<2x32xf32, #tpu.memory_space<vmem>>, vector<2x32xf32>,
    %c0_103 = arith.constant 0 : index
    %c0_104 = arith.constant 0 : index
    %178 = vector.load %arg8[%c0_103, %c0_104] : memref<2x32xf32, #tpu.memory_space<vmem>>, vector<2x32xf32>
    tpu.vector_store %arg8[%c0_103, %c0_104], %174 {strides = array<i32>} : memref<2x32xf32, #tpu.memory_space<vmem>>, vector<2x32xf32>,
    %c0_105 = arith.constant 0 : index
    %c0_106 = arith.constant 0 : index
    %179 = vector.load %arg7[%c0_105, %c0_106] : memref<2x32xf32, #tpu.memory_space<vmem>>, vector<2x32xf32>
    %c0_107 = arith.constant 0 : index
    %c0_108 = arith.constant 0 : index
    %180 = vector.load %arg8[%c0_107, %c0_108] : memref<2x32xf32, #tpu.memory_space<vmem>>, vector<2x32xf32>
    %c14 = arith.constant 14 : index
    %c0_109 = arith.constant 0 : index
    %181 = vector.load %arg9[%c14, %c0_109] : memref<16x128xf32, #tpu.memory_space<vmem>>, vector<2x128xf32>
    %182 = arith.truncf %179 : vector<2x32xf32> to vector<2x32xbf16>
    %c0_110 = arith.constant 0 : index
    %c0_111 = arith.constant 0 : index
    %183 = vector.load %arg2[%c0_110, %c0_111] : memref<32x128xbf16, #tpu.memory_space<vmem>>, vector<32x128xbf16>
    %cst_112 = arith.constant dense<0.000000e+00> : vector<2x128xf32>
    %184 = tpu.matmul %182, %183, %cst_112 {dimension_numbers = #tpu.dot_dimension_numbers<[1], [0], [0], [1], [0, 0, 1, 1], [], []>} : vector<2x32xbf16>, vector<32x128xbf16>, vector<2x128xf32> -> vector<2x128xf32>
    %185 = arith.addf %181, %184 : vector<2x128xf32>
    %186 = arith.negf %185 : vector<2x128xf32>
    %187 = math.exp %186 : vector<2x128xf32>
    %cst_113 = arith.constant 1.000000e+00 : f32
    %188 = vector.broadcast %cst_113 : f32 to vector<2x128xf32>
    %189 = arith.addf %188, %187 : vector<2x128xf32>
    %190 = arith.divf %188, %189 : vector<2x128xf32>
    %191 = vector.extract_strided_slice %190 {offsets = [0, 0], sizes = [2, 32], strides = [1, 1]} : vector<2x128xf32> to vector<2x32xf32>
    %192 = vector.extract_strided_slice %190 {offsets = [0, 32], sizes = [2, 32], strides = [1, 1]} : vector<2x128xf32> to vector<2x32xf32>
    %193 = vector.extract_strided_slice %190 {offsets = [0, 96], sizes = [2, 32], strides = [1, 1]} : vector<2x128xf32> to vector<2x32xf32>
    %194 = vector.extract_strided_slice %185 {offsets = [0, 64], sizes = [2, 32], strides = [1, 1]} : vector<2x128xf32> to vector<2x32xf32>
    %195 = math.tanh %194 : vector<2x32xf32>
    %196 = arith.mulf %192, %180 : vector<2x32xf32>
    %197 = arith.mulf %191, %195 : vector<2x32xf32>
    %198 = arith.addf %196, %197 : vector<2x32xf32>
    %199 = math.tanh %198 : vector<2x32xf32>
    %200 = arith.mulf %193, %199 : vector<2x32xf32>
    %c0_114 = arith.constant 0 : index
    %c0_115 = arith.constant 0 : index
    %201 = vector.load %arg7[%c0_114, %c0_115] : memref<2x32xf32, #tpu.memory_space<vmem>>, vector<2x32xf32>
    tpu.vector_store %arg7[%c0_114, %c0_115], %200 {strides = array<i32>} : memref<2x32xf32, #tpu.memory_space<vmem>>, vector<2x32xf32>,
    %c0_116 = arith.constant 0 : index
    %c0_117 = arith.constant 0 : index
    %202 = vector.load %arg8[%c0_116, %c0_117] : memref<2x32xf32, #tpu.memory_space<vmem>>, vector<2x32xf32>
    tpu.vector_store %arg8[%c0_116, %c0_117], %198 {strides = array<i32>} : memref<2x32xf32, #tpu.memory_space<vmem>>, vector<2x32xf32>,
    %c0_118 = arith.constant 0 : index
    %c0_119 = arith.constant 0 : index
    %203 = vector.load %arg7[%c0_118, %c0_119] : memref<2x32xf32, #tpu.memory_space<vmem>>, vector<2x32xf32>
    %204 = arith.truncf %203 : vector<2x32xf32> to vector<2x32xbf16>
    %c0_120 = arith.constant 0 : index
    %c0_121 = arith.constant 0 : index
    %205 = vector.load %arg4[%c0_120, %c0_121] : memref<32x8xbf16, #tpu.memory_space<vmem>>, vector<32x8xbf16>
    %cst_122 = arith.constant dense<0.000000e+00> : vector<2x8xf32>
    %206 = tpu.matmul %204, %205, %cst_122 {dimension_numbers = #tpu.dot_dimension_numbers<[1], [0], [0], [1], [0, 0, 1, 1], [], []>} : vector<2x32xbf16>, vector<32x8xbf16>, vector<2x8xf32> -> vector<2x8xf32>
    %c0_123 = arith.constant 0 : index
    %c0_124 = arith.constant 0 : index
    %207 = vector.load %arg5[%c0_123, %c0_124] : memref<1x8xf32, #tpu.memory_space<vmem>>, vector<1x8xf32>
    %208 = vector.broadcast %207 : vector<1x8xf32> to vector<2x8xf32>
    %209 = arith.addf %206, %208 : vector<2x8xf32>
    %cst_125 = arith.constant dense<0xFF800000> : vector<2xf32>
    %210 = vector.multi_reduction <maximumf>, %209, %cst_125 [1] : vector<2x8xf32> to vector<2xf32>
    %211 = vector.shape_cast %210 : vector<2xf32> to vector<2x1xf32>
    %212 = vector.broadcast %211 : vector<2x1xf32> to vector<2x8xf32>
    %213 = arith.subf %209, %212 : vector<2x8xf32>
    %214 = math.exp %213 : vector<2x8xf32>
    %cst_126 = arith.constant dense<0.000000e+00> : vector<2xf32>
    %215 = vector.multi_reduction <add>, %214, %cst_126 [1] : vector<2x8xf32> to vector<2xf32>
    %216 = vector.shape_cast %215 : vector<2xf32> to vector<2x1xf32>
    %217 = math.log %216 : vector<2x1xf32>
    %218 = vector.broadcast %217 : vector<2x1xf32> to vector<2x8xf32>
    %219 = arith.subf %213, %218 : vector<2x8xf32>
    %c0_127 = arith.constant 0 : index
    %c0_128 = arith.constant 0 : index
    %220 = vector.load %arg6[%c0_127, %c0_128] : memref<2x8xf32, #tpu.memory_space<vmem>>, vector<2x8xf32>
    tpu.vector_store %arg6[%c0_127, %c0_128], %219 {strides = array<i32>} : memref<2x8xf32, #tpu.memory_space<vmem>>, vector<2x8xf32>,
    return
  }
}

</mosaic_0001>

<llo_original>
// kernel: net_forward.1
$region0: #{net_forward.1}
  #allocation0 [shape = 'u32[]', space=smem, size = 0x4, offset = 0x4, fixed_abs, tag = 'smem constant byte address 0x4 - core index']
  #allocation1 [shape = 'u32[144,128]{1,0:T(1,128)}', space=vmem, size = 0x12000, scoped, tag = 'internal scratch']
  #allocation2 [shape = 'f32[2,32]{1,0:T(2,128)}', space=vmem, size = 0x400, scoped, tag = 'scratch operand']
  #allocation3 [shape = 'f32[2,32]{1,0:T(2,128)}', space=vmem, size = 0x400, scoped, tag = 'scratch operand']
  #allocation4 [shape = 'f32[16,128]{1,0:T(8,128)}', space=vmem, size = 0x2000, scoped, tag = 'scratch operand']
  %s0 = inlined_call_operand.vmem [shape: bf16[16,16], index: 0, kind: input, shape index: {}]
  %s1 = inlined_call_operand.vmem [shape: bf16[16,128], index: 1, kind: input, shape index: {}]
  %s2 = inlined_call_operand.vmem [shape: bf16[32,128], index: 2, kind: input, shape index: {}]
  %s3 = inlined_call_operand.vmem [shape: f32[1,128], index: 3, kind: input, shape index: {}]
  %s4 = inlined_call_operand.vmem [shape: bf16[32,8], index: 4, kind: input, shape index: {}]
  %s5 = inlined_call_operand.vmem [shape: f32[1,8], index: 5, kind: input, shape index: {}]
  %s6 = inlined_call_operand.hbm [shape: f32[2,8], index: 6, kind: output, shape index: {}]
  %s7 = sld [smem:[#allocation0]]
  $region34: #{net_forward.1} parent=0
    _
  %s9 = ssub.s32 1, %s7
  %s10 = scalar_select 0, %s9, %s7
  $region1: #{net_forward.1} parent=0
    #allocation5 [shape = 'u8[1024]{0}', space=vmem, size = 0x400, scoped, tag = 'output window, operand 0, single buffered']
    #allocation6 [shape = 's32[1]{0}', space=sflag, size = 0x4, scoped, tag = 'scoped memory for net_forward.1']
    %11 = vsyncpa [#allocation6], 0
    // Predicated region
    $region2: #{net_forward.1} parent=1 // pred_check
      _
    $region3: #{net_forward.1} parent=1 // pred_check_branch
      %13 = sbr.rel (0) target = $region5
    $region4: #{net_forward.1} parent=1 // pred_region
      _
    $region5: #{net_forward.1} parent=1 // pred_fallthru
      _
    // Predicated region
    $region6: #{net_forward.1} parent=1 // pred_check
      _
    $region7: #{net_forward.1} parent=1 // pred_check_branch
      %15 = sbr.rel (0) target = $region9
    $region8: #{net_forward.1} parent=1 // pred_region
      _
    $region9: #{net_forward.1} parent=1 // pred_fallthru
      _
    // Predicated region
    $region10: #{net_forward.1} parent=1 // pred_check
      _
    $region11: #{net_forward.1} parent=1 // pred_check_branch
      %17 = sbr.rel (0) target = $region13
    $region12: #{net_forward.1} parent=1 // pred_region
      _
    $region13: #{net_forward.1} parent=1 // pred_fallthru
      _
    // Predicated region
    $region14: #{net_forward.1} parent=1 // pred_check
      _
    $region15: #{net_forward.1} parent=1 // pred_check_branch
      %19 = sbr.rel (0) target = $region17
    $region16: #{net_forward.1} parent=1 // pred_region
      _
    $region17: #{net_forward.1} parent=1 // pred_fallthru
      _
    // Predicated region
    $region18: #{net_forward.1} parent=1 // pred_check
      _
    $region19: #{net_forward.1} parent=1 // pred_check_branch
      %21 = sbr.rel (0) target = $region21
    $region20: #{net_forward.1} parent=1 // pred_region
      _
    $region21: #{net_forward.1} parent=1 // pred_fallthru
      _
    // Predicated region
    $region22: #{net_forward.1} parent=1 // pred_check
      _
    $region23: #{net_forward.1} parent=1 // pred_check_branch
      %23 = sbr.rel (0) target = $region25
    $region24: #{net_forward.1} parent=1 // pred_region
      _
    $region25: #{net_forward.1} parent=1 // pred_fallthru
      _
    %v25 = vld [vmem:[%s0] sm:$0xf]
    %v26 = vld [vmem:[%s0 + $0x4] sm:$0xf]
    %v27 = vld [vmem:[%s1] sm:$0xf]
    %v28 = vld [vmem:[%s1 + $0x4] sm:$0xf]
    %v29 = vld [vmem:[%s3] sm:$0x1]
    %v31 = vlaneseq
    %v32 = vshrl.u32 %v31, 7
    %v33 = vsub.s32 0, %v32
    %v34 = vrot.slane %v29, %v33
    %v38 = vunpack.c.l.b16 %v25
    %v39 = vunpack.c.l.b16 %v26
    %v40 = vpack.c.b16 %v39, %v38
    %v43 = vunpack.c.l.b16 %v27
    %v44 = vunpack.c.l.b16 %v28
    %v45 = vpack.c.b16 %v44, %v43
    %vm47 = vcmask 130048
    %v49 = vsel %vm47, %v40, 0
    %51 = vmatprep.subr.bf16.mxu0 0
    %52 = vmatpush1.bf16.msra.mxu0 %v45
    %53 = vmatprep.subr.bf16.mxu0 0
    %54 = vmatpush1.bf16.msra.mxu0 0
    %55 = vmatprep.subr.bf16.mxu0 0
    %56 = vmatpush1.bf16.msra.mxu0 0
    %57 = vmatprep.subr.bf16.mxu0 0
    %58 = vmatpush1.bf16.msra.mxu0 0
    %59 = vmatprep.subr.bf16.mxu0 0
    %60 = vmatpush1.bf16.msra.mxu0 0
    %61 = vmatprep.subr.bf16.mxu0 0
    %62 = vmatpush1.bf16.msra.mxu0 0
    %63 = vmatprep.subr.bf16.mxu0 0
    %64 = vmatpush1.bf16.msra.mxu0 0
    %65 = vmatprep.subr.bf16.mxu0 0
    %66 = vmatpush1.bf16.msra.mxu0 0
    %67 = vmatprep.subr.bf16.mxu0 0
    %68 = vmatpush1.bf16.msra.mxu0 0
    %69 = vmatprep.subr.bf16.mxu0 0
    %70 = vmatpush1.bf16.msra.mxu0 0
    %71 = vmatprep.subr.bf16.mxu0 0
    %72 = vmatpush1.bf16.msra.mxu0 0
    %73 = vmatprep.subr.bf16.mxu0 0
    %74 = vmatpush1.bf16.msra.mxu0 0
    %75 = vmatprep.subr.bf16.mxu0 0
    %76 = vmatpush1.bf16.msra.mxu0 0
    %77 = vmatprep.subr.bf16.mxu0 0
    %78 = vmatpush1.bf16.msra.mxu0 0
    %79 = vmatprep.subr.bf16.mxu0 0
    %80 = vmatpush1.bf16.msra.mxu0 0
    %81 = vmatprep.subr.bf16.mxu0 0
    %82 = vmatpush1.bf16.msra.mxu0 0
    %83 = vmatprep.mubr.bf16.mxu0 0
    %84 = vmatmul.mubr.bf16.gmra.mrb[0].mxu0 %v49
    %v85 = vpop.f32.mrb[0].mxu0
    %v86 = vadd.f32 %v34, %v85
    %v87 = vpop.f32.mrb[0].mxu0
    %v88 = vpop.f32.mrb[0].mxu0
    %v89 = vadd.f32 %v34, %v88
    %v90 = vpop.f32.mrb[0].mxu0
    %91 = vdwg.mxu0
    %92 = vst [vmem:[#allocation4] sm:$0xff] %v86
    %93 = vst [vmem:[#allocation4 + $0x8] sm:$0xff] %v89
    %vm94 = vcmask 254976
    %95 = vst.msk [vmem:[#allocation2] sm:$0x3] %vm94, 0.0
    %96 = vst.msk [vmem:[#allocation3] sm:$0x3] %vm94, 0.0
    %v97 = vld [vmem:[#allocation2] sm:$0x3]
    %v98 = vld [vmem:[#allocation3] sm:$0x3]
    %v99 = vld [vmem:[#allocation4] sm:$0x3]
    %v100 = vpack.c.bf16 %v97, %v97
    %v101 = vld [vmem:[%s2] sm:$0xf]
    %v102 = vld [vmem:[%s2 + $0x4] sm:$0xf]
    %v103 = vld [vmem:[%s2 + $0x8] sm:$0xf]
    %v104 = vld [vmem:[%s2 + $0xc] sm:$0xf]
    %v109 = vunpack.c.l.b16 %v101
    %v110 = vunpack.c.l.b16 %v102
    %v111 = vunpack.c.l.b16 %v103
    %v112 = vunpack.c.l.b16 %v104
    %v113 = vpack.c.b16 %v110, %v109
    %v114 = vpack.c.b16 %v112, %v111
    %vm117 = vcmask 261120
    %v119 = vsel %vm117, %v100, 0
    %121 = vmatprep.subr.bf16.mxu0 0
    %122 = vmatpush1.bf16.msra.mxu0 %v113
    %123 = vmatprep.subr.bf16.mxu0 0
    %124 = vmatpush1.bf16.msra.mxu0 %v114
    %125 = vmatprep.subr.bf16.mxu0 0
    %126 = vmatpush1.bf16.msra.mxu0 0
    %127 = vmatprep.subr.bf16.mxu0 0
    %128 = vmatpush1.bf16.msra.mxu0 0
    %129 = vmatprep.subr.bf16.mxu0 0
    %130 = vmatpush1.bf16.msra.mxu0 0
    %131 = vmatprep.subr.bf16.mxu0 0
    %132 = vmatpush1.bf16.msra.mxu0 0
    %133 = vmatprep.subr.bf16.mxu0 0
    %134 = vmatpush1.bf16.msra.mxu0 0
    %135 = vmatprep.subr.bf16.mxu0 0
    %136 = vmatpush1.bf16.msra.mxu0 0
    %137 = vmatprep.subr.bf16.mxu0 0
    %138 = vmatpush1.bf16.msra.mxu0 0
    %139 = vmatprep.subr.bf16.mxu0 0
    %140 = vmatpush1.bf16.msra.mxu0 0
    %141 = vmatprep.subr.bf16.mxu0 0
    %142 = vmatpush1.bf16.msra.mxu0 0
    %143 = vmatprep.subr.bf16.mxu0 0
    %144 = vmatpush1.bf16.msra.mxu0 0
    %145 = vmatprep.subr.bf16.mxu0 0
    %146 = vmatpush1.bf16.msra.mxu0 0
    %147 = vmatprep.subr.bf16.mxu0 0
    %148 = vmatpush1.bf16.msra.mxu0 0
    %149 = vmatprep.subr.bf16.mxu0 0
    %150 = vmatpush1.bf16.msra.mxu0 0
    %151 = vmatprep.subr.bf16.mxu0 0
    %152 = vmatpush1.bf16.msra.mxu0 0
    %153 = vmatprep.mubr.bf16.mxu0 0
    %154 = vmatmul.mubr.bf16.gmra.mrb[0].mxu0 %v119
    %v155 = vpop.f32.mrb[0].mxu0
    %v156 = vadd.f32 0.0, %v155
    %v157 = vpop.f32.mrb[0].mxu0
    %v158 = vpop.f32.mrb[0].mxu0
    %v159 = vpop.f32.mrb[0].mxu0
    %160 = vdwg.mxu0
    %v161 = vadd.f32 %v99, %v156
    %v162 = vxor.u32 %v161, 2147483648
    %v163 = vmul.f32 %v162, 1.442695
    %v164 = vpow.pop %v163
    %v165 = vadd.f32 %v164, 1.0
    %v166 = vrcp.pop %v165
    %v167 = vmul.f32 1.0, %v166
    %v168 = vtanh.pop %v161
    %170 = vrot.lane.b32.xlu0 %v98, 32
    %v171 = vpop.permute.xlu0 %170
    %v173 = vmul.f32 %v167, %v171
    %175 = vrot.lane.b32.xlu0 %v168, 64
    %v176 = vpop.permute.xlu0 %175
    %v178 = vmul.f32 %v167, %v176
    %180 = vrot.lane.b32.xlu0 %v178, 32
    %v181 = vpop.permute.xlu0 %180
    %v183 = vadd.f32 %v173, %v181
    %v184 = vtanh.pop %v183
    %186 = vrot.lane.b32.xlu0 %v184, 64
    %v187 = vpop.permute.xlu0 %186
    %v189 = vmul.f32 %v167, %v187
    %191 = vrot.lane.b32.xlu0 %v189, 32
    %v192 = vpop.permute.xlu0 %191
    %194 = vst.msk [vmem:[#allocation2] sm:$0x3] %vm94, %v192
    %196 = vrot.lane.b32.xlu0 %v183, 96
    %v197 = vpop.permute.xlu0 %196
    %199 = vst.msk [vmem:[#allocation3] sm:$0x3] %vm94, %v197
    %v200 = vld [vmem:[#allocation2] sm:$0x3]
    %v201 = vld [vmem:[#allocation3] sm:$0x3]
    %v202 = vld [vmem:[#allocation4 + $0x2] sm:$0x3]
    %v203 = vpack.c.bf16 %v200, %v200
    %v204 = vld [vmem:[%s2] sm:$0xf]
    %v205 = vld [vmem:[%s2 + $0x4] sm:$0xf]
    %v206 = vld [vmem:[%s2 + $0x8] sm:$0xf]
    %v207 = vld [vmem:[%s2 + $0xc] sm:$0xf]
    %v212 = vunpack.c.l.b16 %v204
    %v213 = vunpack.c.l.b16 %v205
    %v214 = vunpack.c.l.b16 %v206
    %v215 = vunpack.c.l.b16 %v207
    %v216 = vpack.c.b16 %v213, %v212
    %v217 = vpack.c.b16 %v215, %v214
    %v221 = vsel %vm117, %v203, 0
    %223 = vmatprep.subr.bf16.mxu0 0
    %224 = vmatpush1.bf16.msra.mxu0 %v216
    %225 = vmatprep.subr.bf16.mxu0 0
    %226 = vmatpush1.bf16.msra.mxu0 %v217
    %227 = vmatprep.subr.bf16.mxu0 0
    %228 = vmatpush1.bf16.msra.mxu0 0
    %229 = vmatprep.subr.bf16.mxu0 0
    %230 = vmatpush1.bf16.msra.mxu0 0
    %231 = vmatprep.subr.bf16.mxu0 0
    %232 = vmatpush1.bf16.msra.mxu0 0
    %233 = vmatprep.subr.bf16.mxu0 0
    %234 = vmatpush1.bf16.msra.mxu0 0
    %235 = vmatprep.subr.bf16.mxu0 0
    %236 = vmatpush1.bf16.msra.mxu0 0
    %237 = vmatprep.subr.bf16.mxu0 0
    %238 = vmatpush1.bf16.msra.mxu0 0
    %239 = vmatprep.subr.bf16.mxu0 0
    %240 = vmatpush1.bf16.msra.mxu0 0
    %241 = vmatprep.subr.bf16.mxu0 0
    %242 = vmatpush1.bf16.msra.mxu0 0
    %243 = vmatprep.subr.bf16.mxu0 0
    %244 = vmatpush1.bf16.msra.mxu0 0
    %245 = vmatprep.subr.bf16.mxu0 0
    %246 = vmatpush1.bf16.msra.mxu0 0
    %247 = vmatprep.subr.bf16.mxu0 0
    %248 = vmatpush1.bf16.msra.mxu0 0
    %249 = vmatprep.subr.bf16.mxu0 0
    %250 = vmatpush1.bf16.msra.mxu0 0
    %251 = vmatprep.subr.bf16.mxu0 0
    %252 = vmatpush1.bf16.msra.mxu0 0
    %253 = vmatprep.subr.bf16.mxu0 0
    %254 = vmatpush1.bf16.msra.mxu0 0
    %255 = vmatprep.mubr.bf16.mxu0 0
    %256 = vmatmul.mubr.bf16.gmra.mrb[0].mxu0 %v221
    %v257 = vpop.f32.mrb[0].mxu0
    %v258 = vadd.f32 0.0, %v257
    %v259 = vpop.f32.mrb[0].mxu0
    %v260 = vpop.f32.mrb[0].mxu0
    %v261 = vpop.f32.mrb[0].mxu0
    %262 = vdwg.mxu0
    %v263 = vadd.f32 %v202, %v258
    %v264 = vxor.u32 %v263, 2147483648
    %v265 = vmul.f32 %v264, 1.442695
    %v266 = vpow.pop %v265
    %v267 = vadd.f32 %v266, 1.0
    %v268 = vrcp.pop %v267
    %v269 = vmul.f32 1.0, %v268
    %v270 = vtanh.pop %v263
    %272 = vrot.lane.b32.xlu0 %v201, 32
    %v273 = vpop.permute.xlu0 %272
    %v275 = vmul.f32 %v269, %v273
    %277 = vrot.lane.b32.xlu0 %v270, 64
    %v278 = vpop.permute.xlu0 %277
    %v280 = vmul.f32 %v269, %v278
    %282 = vrot.lane.b32.xlu0 %v280, 32
    %v283 = vpop.permute.xlu0 %282
    %v285 = vadd.f32 %v275, %v283
    %v286 = vtanh.pop %v285
    %288 = vrot.lane.b32.xlu0 %v286, 64
    %v289 = vpop.permute.xlu0 %288
    %v291 = vmul.f32 %v269, %v289
    %293 = vrot.lane.b32.xlu0 %v291, 32
    %v294 = vpop.permute.xlu0 %293
    %296 = vst.msk [vmem:[#allocation2] sm:$0x3] %vm94, %v294
    %298 = vrot.lane.b32.xlu0 %v285, 96
    %v299 = vpop.permute.xlu0 %298
    %301 = vst.msk [vmem:[#allocation3] sm:$0x3] %vm94, %v299
    %v302 = vld [vmem:[#allocation2] sm:$0x3]
    %v303 = vld [vmem:[#allocation3] sm:$0x3]
    %v304 = vld [vmem:[#allocation4 + $0x4] sm:$0x3]
    %v305 = vpack.c.bf16 %v302, %v302
    %v306 = vld [vmem:[%s2] sm:$0xf]
    %v307 = vld [vmem:[%s2 + $0x4] sm:$0xf]
    %v308 = vld [vmem:[%s2 + $0x8] sm:$0xf]
    %v309 = vld [vmem:[%s2 + $0xc] sm:$0xf]
    %v314 = vunpack.c.l.b16 %v306
    %v315 = vunpack.c.l.b16 %v307
    %v316 = vunpack.c.l.b16 %v308
    %v317 = vunpack.c.l.b16 %v309
    %v318 = vpack.c.b16 %v315, %v314
    %v319 = vpack.c.b16 %v317, %v316
    %v323 = vsel %vm117, %v305, 0
    %325 = vmatprep.subr.bf16.mxu0 0
    %326 = vmatpush1.bf16.msra.mxu0 %v318
    %327 = vmatprep.subr.bf16.mxu0 0
    %328 = vmatpush1.bf16.msra.mxu0 %v319
    %329 = vmatprep.subr.bf16.mxu0 0
    %330 = vmatpush1.bf16.msra.mxu0 0
    %331 = vmatprep.subr.bf16.mxu0 0
    %332 = vmatpush1.bf16.msra.mxu0 0
    %333 = vmatprep.subr.bf16.mxu0 0
    %334 = vmatpush1.bf16.msra.mxu0 0
    %335 = vmatprep.subr.bf16.mxu0 0
    %336 = vmatpush1.bf16.msra.mxu0 0
    %337 = vmatprep.subr.bf16.mxu0 0
    %338 = vmatpush1.bf16.msra.mxu0 0
    %339 = vmatprep.subr.bf16.mxu0 0
    %340 = vmatpush1.bf16.msra.mxu0 0
    %341 = vmatprep.subr.bf16.mxu0 0
    %342 = vmatpush1.bf16.msra.mxu0 0
    %343 = vmatprep.subr.bf16.mxu0 0
    %344 = vmatpush1.bf16.msra.mxu0 0
    %345 = vmatprep.subr.bf16.mxu0 0
    %346 = vmatpush1.bf16.msra.mxu0 0
    %347 = vmatprep.subr.bf16.mxu0 0
    %348 = vmatpush1.bf16.msra.mxu0 0
    %349 = vmatprep.subr.bf16.mxu0 0
    %350 = vmatpush1.bf16.msra.mxu0 0
    %351 = vmatprep.subr.bf16.mxu0 0
    %352 = vmatpush1.bf16.msra.mxu0 0
    %353 = vmatprep.subr.bf16.mxu0 0
    %354 = vmatpush1.bf16.msra.mxu0 0
    %355 = vmatprep.subr.bf16.mxu0 0
    %356 = vmatpush1.bf16.msra.mxu0 0
    %357 = vmatprep.mubr.bf16.mxu0 0
    %358 = vmatmul.mubr.bf16.gmra.mrb[0].mxu0 %v323
    %v359 = vpop.f32.mrb[0].mxu0
    %v360 = vadd.f32 0.0, %v359
    %v361 = vpop.f32.mrb[0].mxu0
    %v362 = vpop.f32.mrb[0].mxu0
    %v363 = vpop.f32.mrb[0].mxu0
    %364 = vdwg.mxu0
    %v365 = vadd.f32 %v304, %v360
    %v366 = vxor.u32 %v365, 2147483648
    %v367 = vmul.f32 %v366, 1.442695
    %v368 = vpow.pop %v367
    %v369 = vadd.f32 %v368, 1.0
    %v370 = vrcp.pop %v369
    %v371 = vmul.f32 1.0, %v370
    %v372 = vtanh.pop %v365
    %374 = vrot.lane.b32.xlu0 %v303, 32
    %v375 = vpop.permute.xlu0 %374
    %v377 = vmul.f32 %v371, %v375
    %379 = vrot.lane.b32.xlu0 %v372, 64
    %v380 = vpop.permute.xlu0 %379
    %v382 = vmul.f32 %v371, %v380
    %384 = vrot.lane.b32.xlu0 %v382, 32
    %v385 = vpop.permute.xlu0 %384
    %v387 = vadd.f32 %v377, %v385
    %v388 = vtanh.pop %v387
    %390 = vrot.lane.b32.xlu0 %v388, 64
    %v391 = vpop.permute.xlu0 %390
    %v393 = vmul.f32 %v371, %v391
    %395 = vrot.lane.b32.xlu0 %v393, 32
    %v396 = vpop.permute.xlu0 %395
    %398 = vst.msk [vmem:[#allocation2] sm:$0x3] %vm94, %v396
    %400 = vrot.lane.b32.xlu0 %v387, 96
    %v401 = vpop.permute.xlu0 %400
    %403 = vst.msk [vmem:[#allocation3] sm:$0x3] %vm94, %v401
    %v404 = vld [vmem:[#allocation2] sm:$0x3]
    %v405 = vld [vmem:[#allocation3] sm:$0x3]
    %v406 = vld [vmem:[#allocation4 + $0x6] sm:$0x3]
    %v407 = vpack.c.bf16 %v404, %v404
    %v408 = vld [vmem:[%s2] sm:$0xf]
    %v409 = vld [vmem:[%s2 + $0x4] sm:$0xf]
    %v410 = vld [vmem:[%s2 + $0x8] sm:$0xf]
    %v411 = vld [vmem:[%s2 + $0xc] sm:$0xf]
    %v416 = vunpack.c.l.b16 %v408
    %v417 = vunpack.c.l.b16 %v409
    %v418 = vunpack.c.l.b16 %v410
    %v419 = vunpack.c.l.b16 %v411
    %v420 = vpack.c.b16 %v417, %v416
    %v421 = vpack.c.b16 %v419, %v418
    %v425 = vsel %vm117, %v407, 0
    %427 = vmatprep.subr.bf16.mxu0 0
    %428 = vmatpush1.bf16.msra.mxu0 %v420
    %429 = vmatprep.subr.bf16.mxu0 0
    %430 = vmatpush1.bf16.msra.mxu0 %v421
    %431 = vmatprep.subr.bf16.mxu0 0
    %432 = vmatpush1.bf16.msra.mxu0 0
    %433 = vmatprep.subr.bf16.mxu0 0
    %434 = vmatpush1.bf16.msra.mxu0 0
    %435 = vmatprep.subr.bf16.mxu0 0
    %436 = vmatpush1.bf16.msra.mxu0 0
    %437 = vmatprep.subr.bf16.mxu0 0
    %438 = vmatpush1.bf16.msra.mxu0 0
    %439 = vmatprep.subr.bf16.mxu0 0
    %440 = vmatpush1.bf16.msra.mxu0 0
    %441 = vmatprep.subr.bf16.mxu0 0
    %442 = vmatpush1.bf16.msra.mxu0 0
    %443 = vmatprep.subr.bf16.mxu0 0
    %444 = vmatpush1.bf16.msra.mxu0 0
    %445 = vmatprep.subr.bf16.mxu0 0
    %446 = vmatpush1.bf16.msra.mxu0 0
    %447 = vmatprep.subr.bf16.mxu0 0
    %448 = vmatpush1.bf16.msra.mxu0 0
    %449 = vmatprep.subr.bf16.mxu0 0
    %450 = vmatpush1.bf16.msra.mxu0 0
    %451 = vmatprep.subr.bf16.mxu0 0
    %452 = vmatpush1.bf16.msra.mxu0 0
    %453 = vmatprep.subr.bf16.mxu0 0
    %454 = vmatpush1.bf16.msra.mxu0 0
    %455 = vmatprep.subr.bf16.mxu0 0
    %456 = vmatpush1.bf16.msra.mxu0 0
    %457 = vmatprep.subr.bf16.mxu0 0
    %458 = vmatpush1.bf16.msra.mxu0 0
    %459 = vmatprep.mubr.bf16.mxu0 0
    %460 = vmatmul.mubr.bf16.gmra.mrb[0].mxu0 %v425
    %v461 = vpop.f32.mrb[0].mxu0
    %v462 = vadd.f32 0.0, %v461
    %v463 = vpop.f32.mrb[0].mxu0
    %v464 = vpop.f32.mrb[0].mxu0
    %v465 = vpop.f32.mrb[0].mxu0
    %466 = vdwg.mxu0
    %v467 = vadd.f32 %v406, %v462
    %v468 = vxor.u32 %v467, 2147483648
    %v469 = vmul.f32 %v468, 1.442695
    %v470 = vpow.pop %v469
    %v471 = vadd.f32 %v470, 1.0
    %v472 = vrcp.pop %v471
    %v473 = vmul.f32 1.0, %v472
    %v474 = vtanh.pop %v467
    %476 = vrot.lane.b32.xlu0 %v405, 32
    %v477 = vpop.permute.xlu0 %476
    %v479 = vmul.f32 %v473, %v477
    %481 = vrot.lane.b32.xlu0 %v474, 64
    %v482 = vpop.permute.xlu0 %481
    %v484 = vmul.f32 %v473, %v482
    %486 = vrot.lane.b32.xlu0 %v484, 32
    %v487 = vpop.permute.xlu0 %486
    %v489 = vadd.f32 %v479, %v487
    %v490 = vtanh.pop %v489
    %492 = vrot.lane.b32.xlu0 %v490, 64
    %v493 = vpop.permute.xlu0 %492
    %v495 = vmul.f32 %v473, %v493
    %497 = vrot.lane.b32.xlu0 %v495, 32
    %v498 = vpop.permute.xlu0 %497
    %500 = vst.msk [vmem:[#allocation2] sm:$0x3] %vm94, %v498
    %502 = vrot.lane.b32.xlu0 %v489, 96
    %v503 = vpop.permute.xlu0 %502
    %505 = vst.msk [vmem:[#allocation3] sm:$0x3] %vm94, %v503
    %v506 = vld [vmem:[#allocation2] sm:$0x3]
    %v507 = vld [vmem:[#allocation3] sm:$0x3]
    %v508 = vld [vmem:[#allocation4 + $0x8] sm:$0x3]
    %v509 = vpack.c.bf16 %v506, %v506
    %v510 = vld [vmem:[%s2] sm:$0xf]
    %v511 = vld [vmem:[%s2 + $0x4] sm:$0xf]
    %v512 = vld [vmem:[%s2 + $0x8] sm:$0xf]
    %v513 = vld [vmem:[%s2 + $0xc] sm:$0xf]
    %v518 = vunpack.c.l.b16 %v510
    %v519 = vunpack.c.l.b16 %v511
    %v520 = vunpack.c.l.b16 %v512
    %v521 = vunpack.c.l.b16 %v513
    %v522 = vpack.c.b16 %v519, %v518
    %v523 = vpack.c.b16 %v521, %v520
    %v527 = vsel %vm117, %v509, 0
    %529 = vmatprep.subr.bf16.mxu0 0
    %530 = vmatpush1.bf16.msra.mxu0 %v522
    %531 = vmatprep.subr.bf16.mxu0 0
    %532 = vmatpush1.bf16.msra.mxu0 %v523
    %533 = vmatprep.subr.bf16.mxu0 0
    %534 = vmatpush1.bf16.msra.mxu0 0
    %535 = vmatprep.subr.bf16.mxu0 0
    %536 = vmatpush1.bf16.msra.mxu0 0
    %537 = vmatprep.subr.bf16.mxu0 0
    %538 = vmatpush1.bf16.msra.mxu0 0
    %539 = vmatprep.subr.bf16.mxu0 0
    %540 = vmatpush1.bf16.msra.mxu0 0
    %541 = vmatprep.subr.bf16.mxu0 0
    %542 = vmatpush1.bf16.msra.mxu0 0
    %543 = vmatprep.subr.bf16.mxu0 0
    %544 = vmatpush1.bf16.msra.mxu0 0
    %545 = vmatprep.subr.bf16.mxu0 0
    %546 = vmatpush1.bf16.msra.mxu0 0
    %547 = vmatprep.subr.bf16.mxu0 0
    %548 = vmatpush1.bf16.msra.mxu0 0
    %549 = vmatprep.subr.bf16.mxu0 0
    %550 = vmatpush1.bf16.msra.mxu0 0
    %551 = vmatprep.subr.bf16.mxu0 0
    %552 = vmatpush1.bf16.msra.mxu0 0
    %553 = vmatprep.subr.bf16.mxu0 0
    %554 = vmatpush1.bf16.msra.mxu0 0
    %555 = vmatprep.subr.bf16.mxu0 0
    %556 = vmatpush1.bf16.msra.mxu0 0
    %557 = vmatprep.subr.bf16.mxu0 0
    %558 = vmatpush1.bf16.msra.mxu0 0
    %559 = vmatprep.subr.bf16.mxu0 0
    %560 = vmatpush1.bf16.msra.mxu0 0
    %561 = vmatprep.mubr.bf16.mxu0 0
    %562 = vmatmul.mubr.bf16.gmra.mrb[0].mxu0 %v527
    %v563 = vpop.f32.mrb[0].mxu0
    %v564 = vadd.f32 0.0, %v563
    %v565 = vpop.f32.mrb[0].mxu0
    %v566 = vpop.f32.mrb[0].mxu0
    %v567 = vpop.f32.mrb[0].mxu0
    %568 = vdwg.mxu0
    %v569 = vadd.f32 %v508, %v564
    %v570 = vxor.u32 %v569, 2147483648
    %v571 = vmul.f32 %v570, 1.442695
    %v572 = vpow.pop %v571
    %v573 = vadd.f32 %v572, 1.0
    %v574 = vrcp.pop %v573
    %v575 = vmul.f32 1.0, %v574
    %v576 = vtanh.pop %v569
    %578 = vrot.lane.b32.xlu0 %v507, 32
    %v579 = vpop.permute.xlu0 %578
    %v581 = vmul.f32 %v575, %v579
    %583 = vrot.lane.b32.xlu0 %v576, 64
    %v584 = vpop.permute.xlu0 %583
    %v586 = vmul.f32 %v575, %v584
    %588 = vrot.lane.b32.xlu0 %v586, 32
    %v589 = vpop.permute.xlu0 %588
    %v591 = vadd.f32 %v581, %v589
    %v592 = vtanh.pop %v591
    %594 = vrot.lane.b32.xlu0 %v592, 64
    %v595 = vpop.permute.xlu0 %594
    %v597 = vmul.f32 %v575, %v595
    %599 = vrot.lane.b32.xlu0 %v597, 32
    %v600 = vpop.permute.xlu0 %599
    %602 = vst.msk [vmem:[#allocation2] sm:$0x3] %vm94, %v600
    %604 = vrot.lane.b32.xlu0 %v591, 96
    %v605 = vpop.permute.xlu0 %604
    %607 = vst.msk [vmem:[#allocation3] sm:$0x3] %vm94, %v605
    %v608 = vld [vmem:[#allocation2] sm:$0x3]
    %v609 = vld [vmem:[#allocation3] sm:$0x3]
    %v610 = vld [vmem:[#allocation4 + $0xa] sm:$0x3]
    %v611 = vpack.c.bf16 %v608, %v608
    %v612 = vld [vmem:[%s2] sm:$0xf]
    %v613 = vld [vmem:[%s2 + $0x4] sm:$0xf]
    %v614 = vld [vmem:[%s2 + $0x8] sm:$0xf]
    %v615 = vld [vmem:[%s2 + $0xc] sm:$0xf]
    %v620 = vunpack.c.l.b16 %v612
    %v621 = vunpack.c.l.b16 %v613
    %v622 = vunpack.c.l.b16 %v614
    %v623 = vunpack.c.l.b16 %v615
    %v624 = vpack.c.b16 %v621, %v620
    %v625 = vpack.c.b16 %v623, %v622
    %v629 = vsel %vm117, %v611, 0
    %631 = vmatprep.subr.bf16.mxu0 0
    %632 = vmatpush1.bf16.msra.mxu0 %v624
    %633 = vmatprep.subr.bf16.mxu0 0
    %634 = vmatpush1.bf16.msra.mxu0 %v625
    %635 = vmatprep.subr.bf16.mxu0 0
    %636 = vmatpush1.bf16.msra.mxu0 0
    %637 = vmatprep.subr.bf16.mxu0 0
    %638 = vmatpush1.bf16.msra.mxu0 0
    %639 = vmatprep.subr.bf16.mxu0 0
    %640 = vmatpush1.bf16.msra.mxu0 0
    %641 = vmatprep.subr.bf16.mxu0 0
    %642 = vmatpush1.bf16.msra.mxu0 0
    %643 = vmatprep.subr.bf16.mxu0 0
    %644 = vmatpush1.bf16.msra.mxu0 0
    %645 = vmatprep.subr.bf16.mxu0 0
    %646 = vmatpush1.bf16.msra.mxu0 0
    %647 = vmatprep.subr.bf16.mxu0 0
    %648 = vmatpush1.bf16.msra.mxu0 0
    %649 = vmatprep.subr.bf16.mxu0 0
    %650 = vmatpush1.bf16.msra.mxu0 0
    %651 = vmatprep.subr.bf16.mxu0 0
    %652 = vmatpush1.bf16.msra.mxu0 0
    %653 = vmatprep.subr.bf16.mxu0 0
    %654 = vmatpush1.bf16.msra.mxu0 0
    %655 = vmatprep.subr.bf16.mxu0 0
    %656 = vmatpush1.bf16.msra.mxu0 0
    %657 = vmatprep.subr.bf16.mxu0 0
    %658 = vmatpush1.bf16.msra.mxu0 0
    %659 = vmatprep.subr.bf16.mxu0 0
    %660 = vmatpush1.bf16.msra.mxu0 0
    %661 = vmatprep.subr.bf16.mxu0 0
    %662 = vmatpush1.bf16.msra.mxu0 0
    %663 = vmatprep.mubr.bf16.mxu0 0
    %664 = vmatmul.mubr.bf16.gmra.mrb[0].mxu0 %v629
    %v665 = vpop.f32.mrb[0].mxu0
    %v666 = vadd.f32 0.0, %v665
    %v667 = vpop.f32.mrb[0].mxu0
    %v668 = vpop.f32.mrb[0].mxu0
    %v669 = vpop.f32.mrb[0].mxu0
    %670 = vdwg.mxu0
    %v671 = vadd.f32 %v610, %v666
    %v672 = vxor.u32 %v671, 2147483648
    %v673 = vmul.f32 %v672, 1.442695
    %v674 = vpow.pop %v673
    %v675 = vadd.f32 %v674, 1.0
    %v676 = vrcp.pop %v675
    %v677 = vmul.f32 1.0, %v676
    %v678 = vtanh.pop %v671
    %680 = vrot.lane.b32.xlu0 %v609, 32
    %v681 = vpop.permute.xlu0 %680
    %v683 = vmul.f32 %v677, %v681
    %685 = vrot.lane.b32.xlu0 %v678, 64
    %v686 = vpop.permute.xlu0 %685
    %v688 = vmul.f32 %v677, %v686
    %690 = vrot.lane.b32.xlu0 %v688, 32
    %v691 = vpop.permute.xlu0 %690
    %v693 = vadd.f32 %v683, %v691
    %v694 = vtanh.pop %v693
    %696 = vrot.lane.b32.xlu0 %v694, 64
    %v697 = vpop.permute.xlu0 %696
    %v699 = vmul.f32 %v677, %v697
    %701 = vrot.lane.b32.xlu0 %v699, 32
    %v702 = vpop.permute.xlu0 %701
    %704 = vst.msk [vmem:[#allocation2] sm:$0x3] %vm94, %v702
    %706 = vrot.lane.b32.xlu0 %v693, 96
    %v707 = vpop.permute.xlu0 %706
    %709 = vst.msk [vmem:[#allocation3] sm:$0x3] %vm94, %v707
    %v710 = vld [vmem:[#allocation2] sm:$0x3]
    %v711 = vld [vmem:[#allocation3] sm:$0x3]
    %v712 = vld [vmem:[#allocation4 + $0xc] sm:$0x3]
    %v713 = vpack.c.bf16 %v710, %v710
    %v714 = vld [vmem:[%s2] sm:$0xf]
    %v715 = vld [vmem:[%s2 + $0x4] sm:$0xf]
    %v716 = vld [vmem:[%s2 + $0x8] sm:$0xf]
    %v717 = vld [vmem:[%s2 + $0xc] sm:$0xf]
    %v722 = vunpack.c.l.b16 %v714
    %v723 = vunpack.c.l.b16 %v715
    %v724 = vunpack.c.l.b16 %v716
    %v725 = vunpack.c.l.b16 %v717
    %v726 = vpack.c.b16 %v723, %v722
    %v727 = vpack.c.b16 %v725, %v724
    %v731 = vsel %vm117, %v713, 0
    %733 = vmatprep.subr.bf16.mxu0 0
    %734 = vmatpush1.bf16.msra.mxu0 %v726
    %735 = vmatprep.subr.bf16.mxu0 0
    %736 = vmatpush1.bf16.msra.mxu0 %v727
    %737 = vmatprep.subr.bf16.mxu0 0
    %738 = vmatpush1.bf16.msra.mxu0 0
    %739 = vmatprep.subr.bf16.mxu0 0
    %740 = vmatpush1.bf16.msra.mxu0 0
    %741 = vmatprep.subr.bf16.mxu0 0
    %742 = vmatpush1.bf16.msra.mxu0 0
    %743 = vmatprep.subr.bf16.mxu0 0
    %744 = vmatpush1.bf16.msra.mxu0 0
    %745 = vmatprep.subr.bf16.mxu0 0
    %746 = vmatpush1.bf16.msra.mxu0 0
    %747 = vmatprep.subr.bf16.mxu0 0
    %748 = vmatpush1.bf16.msra.mxu0 0
    %749 = vmatprep.subr.bf16.mxu0 0
    %750 = vmatpush1.bf16.msra.mxu0 0
    %751 = vmatprep.subr.bf16.mxu0 0
    %752 = vmatpush1.bf16.msra.mxu0 0
    %753 = vmatprep.subr.bf16.mxu0 0
    %754 = vmatpush1.bf16.msra.mxu0 0
    %755 = vmatprep.subr.bf16.mxu0 0
    %756 = vmatpush1.bf16.msra.mxu0 0
    %757 = vmatprep.subr.bf16.mxu0 0
    %758 = vmatpush1.bf16.msra.mxu0 0
    %759 = vmatprep.subr.bf16.mxu0 0
    %760 = vmatpush1.bf16.msra.mxu0 0
    %761 = vmatprep.subr.bf16.mxu0 0
    %762 = vmatpush1.bf16.msra.mxu0 0
    %763 = vmatprep.subr.bf16.mxu0 0
    %764 = vmatpush1.bf16.msra.mxu0 0
    %765 = vmatprep.mubr.bf16.mxu0 0
    %766 = vmatmul.mubr.bf16.gmra.mrb[0].mxu0 %v731
    %v767 = vpop.f32.mrb[0].mxu0
    %v768 = vadd.f32 0.0, %v767
    %v769 = vpop.f32.mrb[0].mxu0
    %v770 = vpop.f32.mrb[0].mxu0
    %v771 = vpop.f32.mrb[0].mxu0
    %772 = vdwg.mxu0
    %v773 = vadd.f32 %v712, %v768
    %v774 = vxor.u32 %v773, 2147483648
    %v775 = vmul.f32 %v774, 1.442695
    %v776 = vpow.pop %v775
    %v777 = vadd.f32 %v776, 1.0
    %v778 = vrcp.pop %v777
    %v779 = vmul.f32 1.0, %v778
    %v780 = vtanh.pop %v773
    %782 = vrot.lane.b32.xlu0 %v711, 32
    %v783 = vpop.permute.xlu0 %782
    %v785 = vmul.f32 %v779, %v783
    %787 = vrot.lane.b32.xlu0 %v780, 64
    %v788 = vpop.permute.xlu0 %787
    %v790 = vmul.f32 %v779, %v788
    %792 = vrot.lane.b32.xlu0 %v790, 32
    %v793 = vpop.permute.xlu0 %792
    %v795 = vadd.f32 %v785, %v793
    %v796 = vtanh.pop %v795
    %798 = vrot.lane.b32.xlu0 %v796, 64
    %v799 = vpop.permute.xlu0 %798
    %v801 = vmul.f32 %v779, %v799
    %803 = vrot.lane.b32.xlu0 %v801, 32
    %v804 = vpop.permute.xlu0 %803
    %806 = vst.msk [vmem:[#allocation2] sm:$0x3] %vm94, %v804
    %808 = vrot.lane.b32.xlu0 %v795, 96
    %v809 = vpop.permute.xlu0 %808
    %811 = vst.msk [vmem:[#allocation3] sm:$0x3] %vm94, %v809
    %v812 = vld [vmem:[#allocation2] sm:$0x3]
    %v813 = vld [vmem:[#allocation3] sm:$0x3]
    %v814 = vld [vmem:[#allocation4 + $0xe] sm:$0x3]
    %v815 = vpack.c.bf16 %v812, %v812
    %v816 = vld [vmem:[%s2] sm:$0xf]
    %v817 = vld [vmem:[%s2 + $0x4] sm:$0xf]
    %v818 = vld [vmem:[%s2 + $0x8] sm:$0xf]
    %v819 = vld [vmem:[%s2 + $0xc] sm:$0xf]
    %v824 = vunpack.c.l.b16 %v816
    %v825 = vunpack.c.l.b16 %v817
    %v826 = vunpack.c.l.b16 %v818
    %v827 = vunpack.c.l.b16 %v819
    %v828 = vpack.c.b16 %v825, %v824
    %v829 = vpack.c.b16 %v827, %v826
    %v833 = vsel %vm117, %v815, 0
    %835 = vmatprep.subr.bf16.mxu0 0
    %836 = vmatpush1.bf16.msra.mxu0 %v828
    %837 = vmatprep.subr.bf16.mxu0 0
    %838 = vmatpush1.bf16.msra.mxu0 %v829
    %839 = vmatprep.subr.bf16.mxu0 0
    %840 = vmatpush1.bf16.msra.mxu0 0
    %841 = vmatprep.subr.bf16.mxu0 0
    %842 = vmatpush1.bf16.msra.mxu0 0
    %843 = vmatprep.subr.bf16.mxu0 0
    %844 = vmatpush1.bf16.msra.mxu0 0
    %845 = vmatprep.subr.bf16.mxu0 0
    %846 = vmatpush1.bf16.msra.mxu0 0
    %847 = vmatprep.subr.bf16.mxu0 0
    %848 = vmatpush1.bf16.msra.mxu0 0
    %849 = vmatprep.subr.bf16.mxu0 0
    %850 = vmatpush1.bf16.msra.mxu0 0
    %851 = vmatprep.subr.bf16.mxu0 0
    %852 = vmatpush1.bf16.msra.mxu0 0
    %853 = vmatprep.subr.bf16.mxu0 0
    %854 = vmatpush1.bf16.msra.mxu0 0
    %855 = vmatprep.subr.bf16.mxu0 0
    %856 = vmatpush1.bf16.msra.mxu0 0
    %857 = vmatprep.subr.bf16.mxu0 0
    %858 = vmatpush1.bf16.msra.mxu0 0
    %859 = vmatprep.subr.bf16.mxu0 0
    %860 = vmatpush1.bf16.msra.mxu0 0
    %861 = vmatprep.subr.bf16.mxu0 0
    %862 = vmatpush1.bf16.msra.mxu0 0
    %863 = vmatprep.subr.bf16.mxu0 0
    %864 = vmatpush1.bf16.msra.mxu0 0
    %865 = vmatprep.subr.bf16.mxu0 0
    %866 = vmatpush1.bf16.msra.mxu0 0
    %867 = vmatprep.mubr.bf16.mxu0 0
    %868 = vmatmul.mubr.bf16.gmra.mrb[0].mxu0 %v833
    %v869 = vpop.f32.mrb[0].mxu0
    %v870 = vadd.f32 0.0, %v869
    %v871 = vpop.f32.mrb[0].mxu0
    %v872 = vpop.f32.mrb[0].mxu0
    %v873 = vpop.f32.mrb[0].mxu0
    %874 = vdwg.mxu0
    %v875 = vadd.f32 %v814, %v870
    %v876 = vxor.u32 %v875, 2147483648
    %v877 = vmul.f32 %v876, 1.442695
    %v878 = vpow.pop %v877
    %v879 = vadd.f32 %v878, 1.0
    %v880 = vrcp.pop %v879
    %v881 = vmul.f32 1.0, %v880
    %v882 = vtanh.pop %v875
    %884 = vrot.lane.b32.xlu0 %v813, 32
    %v885 = vpop.permute.xlu0 %884
    %v887 = vmul.f32 %v881, %v885
    %889 = vrot.lane.b32.xlu0 %v882, 64
    %v890 = vpop.permute.xlu0 %889
    %v892 = vmul.f32 %v881, %v890
    %894 = vrot.lane.b32.xlu0 %v892, 32
    %v895 = vpop.permute.xlu0 %894
    %v897 = vadd.f32 %v887, %v895
    %v898 = vtanh.pop %v897
    %900 = vrot.lane.b32.xlu0 %v898, 64
    %v901 = vpop.permute.xlu0 %900
    %v903 = vmul.f32 %v881, %v901
    %905 = vrot.lane.b32.xlu0 %v903, 32
    %v906 = vpop.permute.xlu0 %905
    %908 = vst.msk [vmem:[#allocation2] sm:$0x3] %vm94, %v906
    %910 = vrot.lane.b32.xlu0 %v897, 96
    %v911 = vpop.permute.xlu0 %910
    %913 = vst.msk [vmem:[#allocation3] sm:$0x3] %vm94, %v911
    %v914 = vld [vmem:[#allocation2] sm:$0x3]
    %v915 = vpack.c.bf16 %v914, %v914
    %v916 = vld [vmem:[%s4] sm:$0xf]
    %v917 = vld [vmem:[%s4 + $0x4] sm:$0xf]
    %v918 = vld [vmem:[%s4 + $0x8] sm:$0xf]
    %v919 = vld [vmem:[%s4 + $0xc] sm:$0xf]
    %v920 = vld [vmem:[%s5] sm:$0x1]
    %v922 = vlaneseq
    %v923 = vshrl.u32 %v922, 7
    %v924 = vsub.s32 0, %v923
    %v925 = vrot.slane %v920, %v924
    %v931 = vunpack.c.l.b16 %v916
    %v932 = vunpack.c.l.b16 %v917
    %v933 = vunpack.c.l.b16 %v918
    %v934 = vunpack.c.l.b16 %v919
    %v935 = vpack.c.b16 %v932, %v931
    %v936 = vpack.c.b16 %v934, %v933
    %v940 = vsel %vm117, %v915, 0
    %942 = vmatprep.subr.bf16.mxu0 0
    %943 = vmatpush1.bf16.msra.mxu0 %v935
    %944 = vmatprep.subr.bf16.mxu0 0
    %945 = vmatpush1.bf16.msra.mxu0 %v936
    %946 = vmatprep.subr.bf16.mxu0 0
    %947 = vmatpush1.bf16.msra.mxu0 0
    %948 = vmatprep.subr.bf16.mxu0 0
    %949 = vmatpush1.bf16.msra.mxu0 0
    %950 = vmatprep.subr.bf16.mxu0 0
    %951 = vmatpush1.bf16.msra.mxu0 0
    %952 = vmatprep.subr.bf16.mxu0 0
    %953 = vmatpush1.bf16.msra.mxu0 0
    %954 = vmatprep.subr.bf16.mxu0 0
    %955 = vmatpush1.bf16.msra.mxu0 0
    %956 = vmatprep.subr.bf16.mxu0 0
    %957 = vmatpush1.bf16.msra.mxu0 0
    %958 = vmatprep.subr.bf16.mxu0 0
    %959 = vmatpush1.bf16.msra.mxu0 0
    %960 = vmatprep.subr.bf16.mxu0 0
    %961 = vmatpush1.bf16.msra.mxu0 0
    %962 = vmatprep.subr.bf16.mxu0 0
    %963 = vmatpush1.bf16.msra.mxu0 0
    %964 = vmatprep.subr.bf16.mxu0 0
    %965 = vmatpush1.bf16.msra.mxu0 0
    %966 = vmatprep.subr.bf16.mxu0 0
    %967 = vmatpush1.bf16.msra.mxu0 0
    %968 = vmatprep.subr.bf16.mxu0 0
    %969 = vmatpush1.bf16.msra.mxu0 0
    %970 = vmatprep.subr.bf16.mxu0 0
    %971 = vmatpush1.bf16.msra.mxu0 0
    %972 = vmatprep.subr.bf16.mxu0 0
    %973 = vmatpush1.bf16.msra.mxu0 0
    %974 = vmatprep.mubr.bf16.mxu0 0
    %975 = vmatmul.mubr.bf16.gmra.mrb[0].mxu0 %v940
    %v976 = vpop.f32.mrb[0].mxu0
    %v977 = vadd.f32 %v925, %v976
    %v978 = vpop.f32.mrb[0].mxu0
    %v979 = vpop.f32.mrb[0].mxu0
    %v980 = vpop.f32.mrb[0].mxu0
    %981 = vdwg.mxu0
    %vm982 = vcmask 58368
    %v983 = vsel %vm982, %v977, -inf
    %984 = vmax.xlane.f32.xlu0 %v983
    %v985 = vpop.xlane.xlu0 %984
    %v986 = vsub.f32 %v977, %v985
    %v987 = vmul.f32 %v986, 1.442695
    %v988 = vpow.pop %v987
    %v989 = vsel %vm982, %v988, 0.0
    %990 = vadd.xlane.f32.xlu0 %v989
    %v991 = vpop.xlane.xlu0 %990
    %v992 = vlog2.pop %v991
    %v993 = vmul.f32 %v992, 0.6931472
    %v994 = vsub.f32 %v986, %v993
    %995 = vst.msk [vmem:[#allocation5] sm:$0x3] %vm982, %v994
    // Predicated region
    $region26: #{net_forward.1} parent=1 // pred_check
      _
    $region27: #{net_forward.1} parent=1 // pred_check_branch
      %997 = sbr.rel (0) target = $region29
    $region28: #{net_forward.1} parent=1 // pred_region
      %s999 = ssub.s32 32, 32
      %1000 = vsyncadd [#allocation6], %s999
      %s1002 = sshll.u32 [#allocation5], 4
      %s1003 = int_to_ptr.vmem [resolvable:$true] %s1002
      %1005 = dma.vmem_to_hbm [thread:$0]  %s1003, 32, %s6, [#allocation6]
    $region29: #{net_forward.1} parent=1 // pred_fallthru
      _
    // Predicated region
    $region30: #{net_forward.1} parent=1 // pred_check
      _
    $region31: #{net_forward.1} parent=1 // pred_check_branch
      %1007 = sbr.rel (0) target = $region33
    $region32: #{net_forward.1} parent=1 // pred_region
      %1008 = dma.done [#allocation6], 32
    $region33: #{net_forward.1} parent=1 // pred_fallthru
      _
    %1009 = vsyncpa [#allocation6], 1

</llo_original>
